<compile_context>
chip_gen: v6e
topology: v6e:2x2x1
jax: 0.10.0
libtpu: 0.0.40
codegen_flags: <defaults>
</compile_context>

<pallas_src>
import jax
import jax.numpy as jnp
from jax import lax
from jax.experimental import pallas as pl
from jax.experimental.pallas import tpu as pltpu


def _round_up(x, m):
    return (x + m - 1) // m * m


def _late_fusion_kernel(ppg_ref, hr_ref, th_ref, wp_ref, wh_ref, wt_ref,
                        slab_ref, out_ref):
    # Fused encoders: three small-K matmuls accumulate into one [b_tile, HP]
    # f32 tile (each weight is zero outside its modality's column band).
    h = jnp.dot(ppg_ref[...], wp_ref[...], preferred_element_type=jnp.float32)
    h = h + jnp.dot(hr_ref[...], wh_ref[...], preferred_element_type=jnp.float32)
    h = h + jnp.dot(th_ref[...], wt_ref[...], preferred_element_type=jnp.float32)
    # Bias + ReLU (padded lanes stay exactly 0: ReLU(0 + 0) = 0).
    h = jnp.maximum(h + slab_ref[0:1, :], 0.0)
    # Fused (regressor x fusion-Linear) head: contract the lane dim of h against
    # the fused regressor row -> lane-dense (1, b_tile) result (no masked
    # last-dim-1 stores).  Padded lanes of the regressor row are zero.
    row = lax.dot_general(
        slab_ref[1:2, :], h, (((1,), (1,)), ((), ())),
        preferred_element_type=jnp.float32)
    out_ref[...] = (row + slab_ref[2:3, 0:1])[None]   # (1, 1, b_tile)


def _pick_b_tile(B):
    if B <= 1024:
        return _round_up(B, 8)          # single step; latency-dominated anyway
    # ~4 grid steps keeps both v7x TensorCores fed (>=2 steps each) and leaves
    # the software pipeline something to overlap; 4096-row cap is a few MiB of
    # VMEM per pipeline slot, well under even v5e's 16 MiB scoped default.
    return int(min(4096, _round_up(pl.cdiv(B, 4), 256)))


def late_fusion_forward(ppg_data, thermal_data, hr_data, params, *,
                        b_tile=None, compute_dtype=None):
    B, Dp = ppg_data.shape
    Dh = hr_data.shape[1]
    Dt = thermal_data.shape[1]
    H = params["wp"].shape[1]
    H3 = 3 * H
    HP = max(128, _round_up(H3, 128))   # lane-pad 3H up to whole vregs

    # Activations are streamed as-is (no host concat / pad / cast passes).
    # Casting to bf16 only pays off if it fuses with the producer upstream.
    dtype = compute_dtype if compute_dtype is not None else ppg_data.dtype
    if ppg_data.dtype != dtype:
        ppg_data = ppg_data.astype(dtype)
        hr_data = hr_data.astype(dtype)
        thermal_data = thermal_data.astype(dtype)

    # ---- host-side parameter restructuring (one-time; params are static) ----
    def band(w, lo):
        out = jnp.zeros((w.shape[0], HP), jnp.float32)
        return out.at[:, lo:lo + H].set(w.astype(jnp.float32)).astype(dtype)

    wp = band(params["wp"], 0)          # ppg     -> cols [0,   H)
    wh = band(params["wh"], H)          # hr      -> cols [H,  2H)
    wt = band(params["wt"], 2 * H)      # thermal -> cols [2H, 3H)

    # Fold the fusion Linear(3,1) into the regressors:
    #   wr_fused = concat(wrp*wf0, wrh*wf1, wrt*wf2), b0 = wf·br + bf.
    wf, bf = params["wf"], params["bf"]
    b_enc = jnp.zeros((1, HP), jnp.float32).at[:, :H3].set(
        jnp.concatenate([params["bp"], params["bh"], params["bt"]], axis=1))
    wr_fused = jnp.zeros((1, HP), jnp.float32).at[:, :H3].set(
        jnp.concatenate([params["wrp"][:, 0] * wf[0],
                         params["wrh"][:, 0] * wf[1],
                         params["wrt"][:, 0] * wf[2]])[None, :])
    b0 = (wf[0] * params["brp"][0, 0]
          + wf[1] * params["brh"][0, 0]
          + wf[2] * params["brt"][0, 0]
          + bf[0])
    # One [3, HP] slab: enc bias / fused regressor row / fused output bias.
    slab = jnp.concatenate(
        [b_enc, wr_fused, jnp.full((1, HP), b0, jnp.float32)], axis=0)

    # ---- batch tiling (no host-side padding: Pallas handles the partial tile)
    if b_tile is None:
        b_tile = _pick_b_tile(B)
    b_tile = min(_round_up(int(b_tile), 8), _round_up(B, 8))
    num_tiles = pl.cdiv(B, b_tile)

    out = pl.pallas_call(
        _late_fusion_kernel,
        out_shape=jax.ShapeDtypeStruct((num_tiles, 1, b_tile), jnp.float32),
        grid=(num_tiles,),
        in_specs=[
            pl.BlockSpec((b_tile, Dp), lambda i: (i, 0)),   # ppg   (streamed)
            pl.BlockSpec((b_tile, Dh), lambda i: (i, 0)),   # hr    (streamed)
            pl.BlockSpec((b_tile, Dt), lambda i: (i, 0)),   # therm (streamed)
            pl.BlockSpec((Dp, HP), lambda i: (0, 0)),       # weights: VMEM-resident
            pl.BlockSpec((Dh, HP), lambda i: (0, 0)),
            pl.BlockSpec((Dt, HP), lambda i: (0, 0)),
            pl.BlockSpec((3, HP), lambda i: (0, 0)),        # bias/regressor slab
        ],
        out_specs=pl.BlockSpec((1, 1, b_tile), lambda i: (i, 0, 0)),
        compiler_params=pltpu.CompilerParams(
            dimension_semantics=("parallel",),              # megacore on v7x
        ),
        cost_estimate=pl.CostEstimate(
            flops=2 * B * (Dp + Dh + Dt + 1) * HP,
            transcendentals=0,
            bytes_accessed=(ppg_data.dtype.itemsize * B * (Dp + Dh + Dt)
                            + 4 * ((Dp + Dh + Dt + 3) * HP + num_tiles * b_tile)),
        ),
    )(ppg_data, hr_data, thermal_data, wp, wh, wt, slab)

    # (num_tiles, 1, b_tile) -> (B, 1); rows past B (partial last tile) discarded.
    return out.reshape(num_tiles * b_tile, 1)[:B]


def _reference_forward(ppg_data, thermal_data, hr_data, p):
    def branch(x, w, b, wr, br):
        h = jnp.maximum(x @ w + b, 0.0)
        return h @ wr + br

    ppg_pred = branch(ppg_data, p["wp"], p["bp"], p["wrp"], p["brp"])
    hr_pred = branch(hr_data, p["wh"], p["bh"], p["wrh"], p["brh"])
    th_pred = branch(thermal_data, p["wt"], p["bt"], p["wrt"], p["brt"])
    preds = jnp.concatenate([ppg_pred, hr_pred, th_pred], axis=1)  # [B, 3]
    return preds @ p["wf"][:, None] + p["bf"][0]


def make_params(key, ppg_dim, hr_dim, th_dim, hidden):
    keys = jax.random.split(key, 16)

    def lin(kw, kb, fan_in, fan_out):
        w = jax.random.normal(kw, (fan_in, fan_out), jnp.float32) * 0.1
        b = jax.random.normal(kb, (1, fan_out), jnp.float32) * 0.1
        return w, b

    wp, bp = lin(keys[0], keys[1], ppg_dim, hidden)
    wrp, brp = lin(keys[2], keys[3], hidden, 1)
    wh, bh = lin(keys[4], keys[5], hr_dim, hidden)
    wrh, brh = lin(keys[6], keys[7], hidden, 1)
    wt, bt = lin(keys[8], keys[9], th_dim, hidden)
    wrt, brt = lin(keys[10], keys[11], hidden, 1)
    wf = jax.random.normal(keys[12], (3,), jnp.float32) * 0.1
    bf = jax.random.normal(keys[13], (1,), jnp.float32) * 0.1

    return dict(
        wp=wp, bp=bp, wrp=wrp, brp=brp,
        wh=wh, bh=bh, wrh=wrh, brh=brh,
        wt=wt, bt=bt, wrt=wrt, brt=brt,
        wf=wf, bf=bf,
    )


if __name__ == "__main__":
    # Small demo shapes; B chosen not a multiple of the tile to exercise the
    # partial last block (no host padding) and a multi-step batch grid.
    B, PPG_DIM, HR_DIM, TH_DIM, HIDDEN = 20, 32, 8, 64, 32

    key = jax.random.PRNGKey(0)
    k_ppg, k_th, k_hr, k_param = jax.random.split(key, 4)

    ppg_data = jax.random.normal(k_ppg, (B, PPG_DIM), jnp.float32)
    thermal_data = jax.random.normal(k_th, (B, TH_DIM), jnp.float32)
    hr_data = jax.random.normal(k_hr, (B, HR_DIM), jnp.float32)
    params = make_params(k_param, PPG_DIM, HR_DIM, TH_DIM, HIDDEN)

    out = late_fusion_forward(ppg_data, thermal_data, hr_data, params, b_tile=8)
    out = jax.block_until_ready(out)

    ref = _reference_forward(ppg_data, thermal_data, hr_data, params)
    assert out.shape == (B, 1)
    assert jnp.allclose(out, ref, atol=1e-3, rtol=1e-3), (
        f"max abs err {jnp.max(jnp.abs(out - ref))}"
    )

    print("KERNEL_OK")
</pallas_src>

<mosaic_0001>
module attributes {stable_mosaic.version = 11 : i64} {
  func.func @_late_fusion_kernel(%arg0: i32, %arg1: memref<8x32xf32, #tpu.memory_space<vmem>>, %arg2: memref<8x8xf32, #tpu.memory_space<vmem>>, %arg3: memref<8x64xf32, #tpu.memory_space<vmem>>, %arg4: memref<32x128xf32, #tpu.memory_space<vmem>>, %arg5: memref<8x128xf32, #tpu.memory_space<vmem>>, %arg6: memref<64x128xf32, #tpu.memory_space<vmem>>, %arg7: memref<3x128xf32, #tpu.memory_space<vmem>>, %arg8: memref<1x1x8xf32, #tpu.memory_space<vmem>>) attributes {dimension_semantics = [#tpu.dimension_semantics<parallel>], iteration_bounds = array<i64: 3>, scalar_prefetch = 0 : i64, scratch_operands = 0 : i64, tpu.core_type = #tpu.core_type<tc>, window_params = [{transform_indices = @transform_0, window_bounds = array<i64: 8, 32>}, {transform_indices = @transform_1, window_bounds = array<i64: 8, 8>}, {transform_indices = @transform_2, window_bounds = array<i64: 8, 64>}, {pipeline_mode = #tpu.pipeline_mode<synchronous>, transform_indices = @transform_3, window_bounds = array<i64: 32, 128>}, {pipeline_mode = #tpu.pipeline_mode<synchronous>, transform_indices = @transform_4, window_bounds = array<i64: 8, 128>}, {pipeline_mode = #tpu.pipeline_mode<synchronous>, transform_indices = @transform_5, window_bounds = array<i64: 64, 128>}, {pipeline_mode = #tpu.pipeline_mode<synchronous>, transform_indices = @transform_6, window_bounds = array<i64: 3, 128>}, {transform_indices = @transform_7, window_bounds = array<i64: 1, 1, 8>}]} {
    %c0 = arith.constant 0 : index
    %c0_0 = arith.constant 0 : index
    %0 = vector.load %arg1[%c0, %c0_0] : memref<8x32xf32, #tpu.memory_space<vmem>>, vector<8x32xf32>
    %c0_1 = arith.constant 0 : index
    %c0_2 = arith.constant 0 : index
    %1 = vector.load %arg4[%c0_1, %c0_2] : memref<32x128xf32, #tpu.memory_space<vmem>>, vector<32x128xf32>
    %cst = arith.constant dense<0.000000e+00> : vector<8x128xf32>
    %2 = tpu.matmul %0, %1, %cst {dimension_numbers = #tpu.dot_dimension_numbers<[1], [0], [0], [1], [0, 0, 1, 1], [], []>} : vector<8x32xf32>, vector<32x128xf32>, vector<8x128xf32> -> vector<8x128xf32>
    %c0_3 = arith.constant 0 : index
    %c0_4 = arith.constant 0 : index
    %3 = vector.load %arg2[%c0_3, %c0_4] : memref<8x8xf32, #tpu.memory_space<vmem>>, vector<8x8xf32>
    %c0_5 = arith.constant 0 : index
    %c0_6 = arith.constant 0 : index
    %4 = vector.load %arg5[%c0_5, %c0_6] : memref<8x128xf32, #tpu.memory_space<vmem>>, vector<8x128xf32>
    %cst_7 = arith.constant dense<0.000000e+00> : vector<8x128xf32>
    %5 = tpu.matmul %3, %4, %cst_7 {dimension_numbers = #tpu.dot_dimension_numbers<[1], [0], [0], [1], [0, 0, 1, 1], [], []>} : vector<8x8xf32>, vector<8x128xf32>, vector<8x128xf32> -> vector<8x128xf32>
    %6 = arith.addf %2, %5 : vector<8x128xf32>
    %c0_8 = arith.constant 0 : index
    %c0_9 = arith.constant 0 : index
    %7 = vector.load %arg3[%c0_8, %c0_9] : memref<8x64xf32, #tpu.memory_space<vmem>>, vector<8x64xf32>
    %c0_10 = arith.constant 0 : index
    %c0_11 = arith.constant 0 : index
    %8 = vector.load %arg6[%c0_10, %c0_11] : memref<64x128xf32, #tpu.memory_space<vmem>>, vector<64x128xf32>
    %cst_12 = arith.constant dense<0.000000e+00> : vector<8x128xf32>
    %9 = tpu.matmul %7, %8, %cst_12 {dimension_numbers = #tpu.dot_dimension_numbers<[1], [0], [0], [1], [0, 0, 1, 1], [], []>} : vector<8x64xf32>, vector<64x128xf32>, vector<8x128xf32> -> vector<8x128xf32>
    %10 = arith.addf %6, %9 : vector<8x128xf32>
    %c0_13 = arith.constant 0 : index
    %c0_14 = arith.constant 0 : index
    %11 = vector.load %arg7[%c0_13, %c0_14] : memref<3x128xf32, #tpu.memory_space<vmem>>, vector<1x128xf32>
    %12 = vector.broadcast %11 : vector<1x128xf32> to vector<8x128xf32>
    %13 = arith.addf %10, %12 : vector<8x128xf32>
    %cst_15 = arith.constant 0.000000e+00 : f32
    %14 = vector.broadcast %cst_15 : f32 to vector<8x128xf32>
    %15 = arith.maximumf %13, %14 : vector<8x128xf32>
    %c1 = arith.constant 1 : index
    %c0_16 = arith.constant 0 : index
    %16 = vector.load %arg7[%c1, %c0_16] : memref<3x128xf32, #tpu.memory_space<vmem>>, vector<1x128xf32>
    %cst_17 = arith.constant dense<0.000000e+00> : vector<1x8xf32>
    %17 = tpu.matmul %16, %15, %cst_17 {dimension_numbers = #tpu.dot_dimension_numbers<[1], [1], [0], [0], [0, 0, 1, 0], [], []>} : vector<1x128xf32>, vector<8x128xf32>, vector<1x8xf32> -> vector<1x8xf32>
    %c2 = arith.constant 2 : index
    %c0_18 = arith.constant 0 : index
    %18 = vector.load %arg7[%c2, %c0_18] : memref<3x128xf32, #tpu.memory_space<vmem>>, vector<1x1xf32>
    %19 = vector.broadcast %18 : vector<1x1xf32> to vector<1x8xf32>
    %20 = arith.addf %17, %19 : vector<1x8xf32>
    %21 = vector.shape_cast %20 : vector<1x8xf32> to vector<1x1x8xf32>
    %c0_19 = arith.constant 0 : index
    %c0_20 = arith.constant 0 : index
    %c0_21 = arith.constant 0 : index
    %22 = vector.load %arg8[%c0_19, %c0_20, %c0_21] : memref<1x1x8xf32, #tpu.memory_space<vmem>>, vector<1x1x8xf32>
    tpu.vector_store %arg8[%c0_19, %c0_20, %c0_21], %21 {strides = array<i32>} : memref<1x1x8xf32, #tpu.memory_space<vmem>>, vector<1x1x8xf32>,
    return
  }
  func.func @transform_0(%arg0: i32) -> (i32, i32) {
    %c0_i32 = arith.constant 0 : i32
    %c0_i32_0 = arith.constant 0 : i32
    return %arg0, %c0_i32 : i32, i32
  }
  func.func @transform_1(%arg0: i32) -> (i32, i32) {
    %c0_i32 = arith.constant 0 : i32
    %c0_i32_0 = arith.constant 0 : i32
    return %arg0, %c0_i32 : i32, i32
  }
  func.func @transform_2(%arg0: i32) -> (i32, i32) {
    %c0_i32 = arith.constant 0 : i32
    %c0_i32_0 = arith.constant 0 : i32
    return %arg0, %c0_i32 : i32, i32
  }
  func.func @transform_3(%arg0: i32) -> (i32, i32) {
    %c0_i32 = arith.constant 0 : i32
    %c0_i32_0 = arith.constant 0 : i32
    %c0_i32_1 = arith.constant 0 : i32
    return %c0_i32, %c0_i32_0 : i32, i32
  }
  func.func @transform_4(%arg0: i32) -> (i32, i32) {
    %c0_i32 = arith.constant 0 : i32
    %c0_i32_0 = arith.constant 0 : i32
    %c0_i32_1 = arith.constant 0 : i32
    return %c0_i32, %c0_i32_0 : i32, i32
  }
  func.func @transform_5(%arg0: i32) -> (i32, i32) {
    %c0_i32 = arith.constant 0 : i32
    %c0_i32_0 = arith.constant 0 : i32
    %c0_i32_1 = arith.constant 0 : i32
    return %c0_i32, %c0_i32_0 : i32, i32
  }
  func.func @transform_6(%arg0: i32) -> (i32, i32) {
    %c0_i32 = arith.constant 0 : i32
    %c0_i32_0 = arith.constant 0 : i32
    %c0_i32_1 = arith.constant 0 : i32
    return %c0_i32, %c0_i32_0 : i32, i32
  }
  func.func @transform_7(%arg0: i32) -> (i32, i32, i32) {
    %c0_i32 = arith.constant 0 : i32
    %c0_i32_0 = arith.constant 0 : i32
    %c0_i32_1 = arith.constant 0 : i32
    return %arg0, %c0_i32, %c0_i32_0 : i32, i32, i32
  }
}

</mosaic_0001>

<llo_original>
// kernel: tpu_custom_call.1
$region0: #{tpu_custom_call.1}
  #allocation0 [shape = 'u32[]', space=smem, size = 0x4, offset = 0x4, fixed_abs, tag = 'smem constant byte address 0x4 - core index']
  #allocation1 [shape = 'u32[144,128]{1,0:T(1,128)}', space=vmem, size = 0x12000, scoped, tag = 'internal scratch']
  %s0 = inlined_call_operand.hbm [shape: f32[20,32], index: 0, kind: input, shape index: {}]
  %s1 = inlined_call_operand.vmem [shape: f32[20,8], index: 1, kind: input, shape index: {}]
  %s2 = inlined_call_operand.hbm [shape: f32[20,64], index: 2, kind: input, shape index: {}]
  %s3 = inlined_call_operand.vmem [shape: f32[32,128], index: 3, kind: input, shape index: {}]
  %s4 = inlined_call_operand.hbm [shape: f32[8,128], index: 4, kind: input, shape index: {}]
  %s5 = inlined_call_operand.hbm [shape: f32[64,128], index: 5, kind: input, shape index: {}]
  %s6 = inlined_call_operand.vmem [shape: f32[3,128], index: 6, kind: input, shape index: {}]
  %s7 = inlined_call_operand.hbm [shape: f32[3,1,8], index: 7, kind: output, shape index: {}]
  %s8 = sld [smem:[#allocation0]]
  $region77: #{tpu_custom_call.1} parent=0
    _
  %s10 = ssub.s32 1, %s8
  %s11 = scalar_select 0, %s10, %s8
  $region1: #{tpu_custom_call.1} parent=0
    #allocation2 [shape = 'u8[8192]{0}', space=vmem, size = 0x2000, scoped, tag = 'input window, operand 0']
    #allocation3 [shape = 's32[2]{0}', space=sflag, size = 0x8, scoped, tag = 'scoped memory for tpu_custom_call.1']
    #allocation4 [shape = 's32[2]{0}', space=sflag, size = 0x8, scoped, tag = 'scoped memory for tpu_custom_call.1']
    #allocation5 [shape = 'u8[8192]{0}', space=vmem, size = 0x2000, scoped, tag = 'input window, operand 2']
    #allocation6 [shape = 's32[2]{0}', space=sflag, size = 0x8, scoped, tag = 'scoped memory for tpu_custom_call.1']
    #allocation7 [shape = 'u8[4096]{0}', space=vmem, size = 0x1000, scoped, tag = 'input window, operand 4, single buffered']
    #allocation8 [shape = 'u8[32768]{0}', space=vmem, size = 0x8000, scoped, tag = 'input window, operand 5, single buffered']
    #allocation9 [shape = 's32[1]{0}', space=sflag, size = 0x4, scoped, tag = 'scoped memory for tpu_custom_call.1']
    #allocation10 [shape = 'u8[1024]{0}', space=vmem, size = 0x400, scoped, tag = 'output window, operand 0']
    %12 = vsyncpa [#allocation3], 0
    %s13 = scalar_lea.sflag [#allocation3], 1
    %14 = vsyncpa %s13, 0
    %15 = vsyncpa [#allocation6], 0
    %s16 = scalar_lea.sflag [#allocation6], 1
    %17 = vsyncpa %s16, 0
    %18 = vsyncpa [#allocation9], 0
    %19 = vsyncpa [#allocation4], 0
    %s20 = scalar_lea.sflag [#allocation4], 1
    %21 = vsyncpa %s20, 0
    loop: start=0, step=1, limit=5
    $region2: #{tpu_custom_call.1} parent=1 // loop_pre_header
      _
    $region3: #{tpu_custom_call.1} parent=1 // loop_header
      %s23 = sphi 0, %s27
      %p24 = scmp.ge.s32.totalorder %s23, 5
      %s33 = sphi 0, %s35
      %s36 = sphi 0, %s33
      %s37 = sphi 0, %s36
      %s53 = sphi 0, %s37
      %s59 = sphi 0, %s61
      %s62 = sphi 0, %s59
      %s63 = sphi 0, %s62
      %s79 = sphi 0, %s63
      %s85 = sphi 0, %s87
      %s88 = sphi 0, %s85
      %s89 = sphi 0, %s88
      %s105 = sphi 0, %s89
      %s109 = sphi 0, %s109
      %s111 = sphi 0, %s109
      %s112 = sphi 0, %s111
      %s126 = sphi 0, %s112
      %s130 = sphi 0, %s130
      %s132 = sphi 0, %s130
      %s133 = sphi 0, %s132
      %s147 = sphi 0, %s133
      %s151 = sphi 0, %s151
      %s153 = sphi 0, %s151
      %s154 = sphi 0, %s153
      %s168 = sphi 0, %s154
      %s172 = sphi 0, %s172
      %s174 = sphi 0, %s172
      %s175 = sphi 0, %s174
      %s189 = sphi 0, %s175
      %s195 = sphi 0, %s197
      %s198 = sphi 0, %s195
      %s199 = sphi 0, %s198
      %s215 = sphi 0, %s199
    $region4: #{tpu_custom_call.1} parent=1 // loop_header_branch
      %26 = sbr.rel (%p24) target = $region8
    $region5: #{tpu_custom_call.1} parent=1 // loop_body
      %s28 = ssub.s32 %s23, 1
      %s29 = ssub.s32 %s23, 2
      %s30 = sadd.s32 %s23, 1
      %s31 = ssub.s32 %s23, %s30
      %p32 = scmp.eq.s32.totalorder %s31, 0
      %s34 = sadd.s32 %s33, 1
      %s35 = scalar_select %p32, %s33, %s34
      %p38 = pneg %p32
      %p39 = scmp.eq.s32.totalorder %s23, 2
      %p40 = por %p38, %p39
      %p41 = scmp.ne.s32.totalorder %s33, %s36
      %p42 = scmp.eq.s32.totalorder %s23, 0
      %p43 = por %p41, %p42
      %p44 = scmp.ne.s32.totalorder %s33, %s36
      %p45 = scmp.eq.s32.totalorder %s28, 2
      %p46 = por %p44, %p45
      %p47 = scmp.ne.s32.totalorder %s36, %s37
      %p48 = scmp.eq.s32.totalorder %s28, 0
      %p49 = por %p47, %p48
      %p50 = scmp.ne.s32.totalorder %s36, %s37
      %p51 = scmp.eq.s32.totalorder %s29, 2
      %p52 = por %p50, %p51
      %p54 = scmp.ne.s32.totalorder %s37, %s53
      %p55 = scmp.eq.s32.totalorder %s29, 0
      %p56 = por %p54, %p55
      %s57 = ssub.s32 %s23, %s30
      %p58 = scmp.eq.s32.totalorder %s57, 0
      %s60 = sadd.s32 %s59, 1
      %s61 = scalar_select %p58, %s59, %s60
      %p64 = pneg %p58
      %p65 = scmp.eq.s32.totalorder %s23, 2
      %p66 = por %p64, %p65
      %p67 = scmp.ne.s32.totalorder %s59, %s62
      %p68 = scmp.eq.s32.totalorder %s23, 0
      %p69 = por %p67, %p68
      %p70 = scmp.ne.s32.totalorder %s59, %s62
      %p71 = scmp.eq.s32.totalorder %s28, 2
      %p72 = por %p70, %p71
      %p73 = scmp.ne.s32.totalorder %s62, %s63
      %p74 = scmp.eq.s32.totalorder %s28, 0
      %p75 = por %p73, %p74
      %p76 = scmp.ne.s32.totalorder %s62, %s63
      %p77 = scmp.eq.s32.totalorder %s29, 2
      %p78 = por %p76, %p77
      %p80 = scmp.ne.s32.totalorder %s63, %s79
      %p81 = scmp.eq.s32.totalorder %s29, 0
      %p82 = por %p80, %p81
      %s83 = ssub.s32 %s23, %s30
      %p84 = scmp.eq.s32.totalorder %s83, 0
      %s86 = sadd.s32 %s85, 1
      %s87 = scalar_select %p84, %s85, %s86
      %p90 = pneg %p84
      %p91 = scmp.eq.s32.totalorder %s23, 2
      %p92 = por %p90, %p91
      %p93 = scmp.ne.s32.totalorder %s85, %s88
      %p94 = scmp.eq.s32.totalorder %s23, 0
      %p95 = por %p93, %p94
      %p96 = scmp.ne.s32.totalorder %s85, %s88
      %p97 = scmp.eq.s32.totalorder %s28, 2
      %p98 = por %p96, %p97
      %p99 = scmp.ne.s32.totalorder %s88, %s89
      %p100 = scmp.eq.s32.totalorder %s28, 0
      %p101 = por %p99, %p100
      %p102 = scmp.ne.s32.totalorder %s88, %s89
      %p103 = scmp.eq.s32.totalorder %s29, 2
      %p104 = por %p102, %p103
      %p106 = scmp.ne.s32.totalorder %s89, %s105
      %p107 = scmp.eq.s32.totalorder %s29, 0
      %p108 = por %p106, %p107
      %s110 = sadd.s32 %s109, 1
      %p113 = scmp.eq.s32.totalorder %s23, 2
      %p114 = scmp.ne.s32.totalorder %s109, %s111
      %p115 = scmp.eq.s32.totalorder %s23, 0
      %p116 = por %p114, %p115
      %p117 = scmp.ne.s32.totalorder %s109, %s111
      %p118 = scmp.eq.s32.totalorder %s28, 2
      %p119 = por %p117, %p118
      %p120 = scmp.ne.s32.totalorder %s111, %s112
      %p121 = scmp.eq.s32.totalorder %s28, 0
      %p122 = por %p120, %p121
      %p123 = scmp.ne.s32.totalorder %s111, %s112
      %p124 = scmp.eq.s32.totalorder %s29, 2
      %p125 = por %p123, %p124
      %p127 = scmp.ne.s32.totalorder %s112, %s126
      %p128 = scmp.eq.s32.totalorder %s29, 0
      %p129 = por %p127, %p128
      %s131 = sadd.s32 %s130, 1
      %p134 = scmp.eq.s32.totalorder %s23, 2
      %p135 = scmp.ne.s32.totalorder %s130, %s132
      %p136 = scmp.eq.s32.totalorder %s23, 0
      %p137 = por %p135, %p136
      %p138 = scmp.ne.s32.totalorder %s130, %s132
      %p139 = scmp.eq.s32.totalorder %s28, 2
      %p140 = por %p138, %p139
      %p141 = scmp.ne.s32.totalorder %s132, %s133
      %p142 = scmp.eq.s32.totalorder %s28, 0
      %p143 = por %p141, %p142
      %p144 = scmp.ne.s32.totalorder %s132, %s133
      %p145 = scmp.eq.s32.totalorder %s29, 2
      %p146 = por %p144, %p145
      %p148 = scmp.ne.s32.totalorder %s133, %s147
      %p149 = scmp.eq.s32.totalorder %s29, 0
      %p150 = por %p148, %p149
      %s152 = sadd.s32 %s151, 1
      %p155 = scmp.eq.s32.totalorder %s23, 2
      %p156 = scmp.ne.s32.totalorder %s151, %s153
      %p157 = scmp.eq.s32.totalorder %s23, 0
      %p158 = por %p156, %p157
      %p159 = scmp.ne.s32.totalorder %s151, %s153
      %p160 = scmp.eq.s32.totalorder %s28, 2
      %p161 = por %p159, %p160
      %p162 = scmp.ne.s32.totalorder %s153, %s154
      %p163 = scmp.eq.s32.totalorder %s28, 0
      %p164 = por %p162, %p163
      %p165 = scmp.ne.s32.totalorder %s153, %s154
      %p166 = scmp.eq.s32.totalorder %s29, 2
      %p167 = por %p165, %p166
      %p169 = scmp.ne.s32.totalorder %s154, %s168
      %p170 = scmp.eq.s32.totalorder %s29, 0
      %p171 = por %p169, %p170
      %s173 = sadd.s32 %s172, 1
      %p176 = scmp.eq.s32.totalorder %s23, 2
      %p177 = scmp.ne.s32.totalorder %s172, %s174
      %p178 = scmp.eq.s32.totalorder %s23, 0
      %p179 = por %p177, %p178
      %p180 = scmp.ne.s32.totalorder %s172, %s174
      %p181 = scmp.eq.s32.totalorder %s28, 2
      %p182 = por %p180, %p181
      %p183 = scmp.ne.s32.totalorder %s174, %s175
      %p184 = scmp.eq.s32.totalorder %s28, 0
      %p185 = por %p183, %p184
      %p186 = scmp.ne.s32.totalorder %s174, %s175
      %p187 = scmp.eq.s32.totalorder %s29, 2
      %p188 = por %p186, %p187
      %p190 = scmp.ne.s32.totalorder %s175, %s189
      %p191 = scmp.eq.s32.totalorder %s29, 0
      %p192 = por %p190, %p191
      %s193 = ssub.s32 %s23, %s30
      %p194 = scmp.eq.s32.totalorder %s193, 0
      %s196 = sadd.s32 %s195, 1
      %s197 = scalar_select %p194, %s195, %s196
      %p200 = pneg %p194
      %p201 = scmp.eq.s32.totalorder %s23, 2
      %p202 = por %p200, %p201
      %p203 = scmp.ne.s32.totalorder %s195, %s198
      %p204 = scmp.eq.s32.totalorder %s23, 0
      %p205 = por %p203, %p204
      %p206 = scmp.ne.s32.totalorder %s195, %s198
      %p207 = scmp.eq.s32.totalorder %s28, 2
      %p208 = por %p206, %p207
      %p209 = scmp.ne.s32.totalorder %s198, %s199
      %p210 = scmp.eq.s32.totalorder %s28, 0
      %p211 = por %p209, %p210
      %p212 = scmp.ne.s32.totalorder %s198, %s199
      %p213 = scmp.eq.s32.totalorder %s29, 2
      %p214 = por %p212, %p213
      %p216 = scmp.ne.s32.totalorder %s199, %s215
      %p217 = scmp.eq.s32.totalorder %s29, 0
      %p218 = por %p216, %p217
      %p219 = scmp.le.s32.totalorder 1, %s23
      %p220 = scmp.lt.s32.totalorder %s23, 4
      %p221 = pnand %p219, %p220
      %p222 = pneg %p221
      // Predicated region
      $region9: #{tpu_custom_call.1} parent=5 // pred_check
        _
      $region10: #{tpu_custom_call.1} parent=5 // pred_check_branch
        %224 = sbr.rel (%p221) target = $region12
      $region11: #{tpu_custom_call.1} parent=5 // pred_region
        %s225 = ssub.s32 %s23, 1
        // Predicated region
        $region13: #{tpu_custom_call.1} parent=11 // pred_check
          %p226 = pneg %p122
        $region14: #{tpu_custom_call.1} parent=11 // pred_check_branch
          %228 = sbr.rel (%p226) target = $region16
        $region15: #{tpu_custom_call.1} parent=11 // pred_region
          _
        $region16: #{tpu_custom_call.1} parent=11 // pred_fallthru
          _
        // Predicated region
        $region17: #{tpu_custom_call.1} parent=11 // pred_check
          %p229 = pneg %p143
        $region18: #{tpu_custom_call.1} parent=11 // pred_check_branch
          %231 = sbr.rel (%p229) target = $region20
        $region19: #{tpu_custom_call.1} parent=11 // pred_region
          %s233 = ssub.s32 128, 128
          %234 = vsyncadd [#allocation6], %s233
          %s236 = sshll.u32 [#allocation7], 4
          %s237 = int_to_ptr.vmem [resolvable:$true] %s236
          %239 = dma.hbm_to_vmem [thread:$0]  %s4, 128, %s237, [#allocation6]
        $region20: #{tpu_custom_call.1} parent=11 // pred_fallthru
          _
        // Predicated region
        $region21: #{tpu_custom_call.1} parent=11 // pred_check
          %p240 = pneg %p164
        $region22: #{tpu_custom_call.1} parent=11 // pred_check_branch
          %242 = sbr.rel (%p240) target = $region24
        $region23: #{tpu_custom_call.1} parent=11 // pred_region
          %s244 = ssub.s32 1024, 1024
          %245 = vsyncadd [#allocation9], %s244
          %s246 = sshll.u32 [#allocation8], 4
          %s247 = int_to_ptr.vmem [resolvable:$true] %s246
          %252 = dma.hbm_to_vmem [thread:$0]  %s5, 1024, %s247, [#allocation9], 128, 128, 8
        $region24: #{tpu_custom_call.1} parent=11 // pred_fallthru
          _
        // Predicated region
        $region25: #{tpu_custom_call.1} parent=11 // pred_check
          %p253 = pneg %p185
        $region26: #{tpu_custom_call.1} parent=11 // pred_check_branch
          %255 = sbr.rel (%p253) target = $region28
        $region27: #{tpu_custom_call.1} parent=11 // pred_region
          _
        $region28: #{tpu_custom_call.1} parent=11 // pred_fallthru
          _
      $region12: #{tpu_custom_call.1} parent=5 // pred_fallthru
        _
      %p256 = scmp.lt.s32.totalorder %s23, 3
      // Predicated region
      $region29: #{tpu_custom_call.1} parent=5 // pred_check
        %p257 = pneg %p256
      $region30: #{tpu_custom_call.1} parent=5 // pred_check_branch
        %259 = sbr.rel (%p257) target = $region32
      $region31: #{tpu_custom_call.1} parent=5 // pred_region
        // Predicated region
        $region33: #{tpu_custom_call.1} parent=31 // pred_check
          %p260 = pneg %p43
        $region34: #{tpu_custom_call.1} parent=31 // pred_check_branch
          %262 = sbr.rel (%p260) target = $region36
        $region35: #{tpu_custom_call.1} parent=31 // pred_region
          %s263 = sand.u32 %s33, 1
          %s264 = scalar_lea.sflag [#allocation3], %s263
          %s265 = sand.u32 %s33, 1
          %s266 = smul.addr %s265, 8
          %s267 = scalar_lea.vmem [#allocation2], %s266
          %s269 = ssub.s32 128, 128
          %270 = vsyncadd %s264, %s269
          %s271 = smul.addr %s23, 128
          %s272 = scalar_lea.hbm %s0, %s271
          %s274 = sshll.u32 %s267, 4
          %s275 = int_to_ptr.vmem [resolvable:$true] %s274
          %277 = dma.hbm_to_vmem [thread:$0]  %s272, 128, %s275, %s264
        $region36: #{tpu_custom_call.1} parent=31 // pred_fallthru
          _
        // Predicated region
        $region37: #{tpu_custom_call.1} parent=31 // pred_check
          %p278 = pneg %p69
        $region38: #{tpu_custom_call.1} parent=31 // pred_check_branch
          %280 = sbr.rel (%p278) target = $region40
        $region39: #{tpu_custom_call.1} parent=31 // pred_region
          %p281 = scmp.lt.s32.totalorder %s23, 2
          %s282 = scalar_select %p281, %s23, 2
          %s283 = smul.addr %s282, 8
          %s284 = scalar_lea.vmem %s1, %s283
        $region40: #{tpu_custom_call.1} parent=31 // pred_fallthru
          _
        // Predicated region
        $region41: #{tpu_custom_call.1} parent=31 // pred_check
          %p285 = pneg %p95
        $region42: #{tpu_custom_call.1} parent=31 // pred_check_branch
          %287 = sbr.rel (%p285) target = $region44
        $region43: #{tpu_custom_call.1} parent=31 // pred_region
          %s288 = sand.u32 %s23, 1
          %s289 = scalar_lea.sflag [#allocation6], %s288
          %s290 = sand.u32 %s85, 1
          %s291 = smul.addr %s290, 8
          %s292 = scalar_lea.vmem [#allocation5], %s291
          %s294 = ssub.s32 128, 128
          %295 = vsyncadd %s289, %s294
          %s296 = smul.addr %s23, 128
          %s297 = scalar_lea.hbm %s2, %s296
          %s299 = sshll.u32 %s292, 4
          %s300 = int_to_ptr.vmem [resolvable:$true] %s299
          %302 = dma.hbm_to_vmem [thread:$0]  %s297, 128, %s300, %s289
        $region44: #{tpu_custom_call.1} parent=31 // pred_fallthru
          _
      $region32: #{tpu_custom_call.1} parent=5 // pred_fallthru
        _
      %p303 = scmp.le.s32.totalorder 1, %s23
      %p304 = scmp.lt.s32.totalorder %s23, 4
      %p305 = pnand %p303, %p304
      %p306 = pneg %p305
      // Predicated region
      $region45: #{tpu_custom_call.1} parent=5 // pred_check
        _
      $region46: #{tpu_custom_call.1} parent=5 // pred_check_branch
        %308 = sbr.rel (%p305) target = $region48
      $region47: #{tpu_custom_call.1} parent=5 // pred_region
        %s309 = ssub.s32 %s23, 1
        %s310 = sand.u32 %s36, 1
        %s311 = scalar_lea.sflag [#allocation3], %s310
        %s312 = sand.u32 %s36, 1
        %s313 = smul.addr %s312, 8
        %s314 = scalar_lea.vmem [#allocation2], %s313
        // Predicated region
        $region49: #{tpu_custom_call.1} parent=47 // pred_check
          %p315 = pneg %p49
        $region50: #{tpu_custom_call.1} parent=47 // pred_check_branch
          %317 = sbr.rel (%p315) target = $region52
        $region51: #{tpu_custom_call.1} parent=47 // pred_region
          %318 = dma.done %s311, 128
        $region52: #{tpu_custom_call.1} parent=47 // pred_fallthru
          _
        %s319 = sand.u32 %s28, 1
        %s320 = scalar_lea.sflag [#allocation6], %s319
        %s321 = sand.u32 %s88, 1
        %s322 = smul.addr %s321, 8
        %s323 = scalar_lea.vmem [#allocation5], %s322
        // Predicated region
        $region53: #{tpu_custom_call.1} parent=47 // pred_check
          %p324 = pneg %p101
        $region54: #{tpu_custom_call.1} parent=47 // pred_check_branch
          %326 = sbr.rel (%p324) target = $region56
        $region55: #{tpu_custom_call.1} parent=47 // pred_region
          %327 = dma.done %s320, 128
        $region56: #{tpu_custom_call.1} parent=47 // pred_fallthru
          _
        // Predicated region
        $region57: #{tpu_custom_call.1} parent=47 // pred_check
          %p328 = pneg %p143
        $region58: #{tpu_custom_call.1} parent=47 // pred_check_branch
          %330 = sbr.rel (%p328) target = $region60
        $region59: #{tpu_custom_call.1} parent=47 // pred_region
          %331 = dma.done [#allocation6], 128
        $region60: #{tpu_custom_call.1} parent=47 // pred_fallthru
          _
        // Predicated region
        $region61: #{tpu_custom_call.1} parent=47 // pred_check
          %p332 = pneg %p164
        $region62: #{tpu_custom_call.1} parent=47 // pred_check_branch
          %334 = sbr.rel (%p332) target = $region64
        $region63: #{tpu_custom_call.1} parent=47 // pred_region
          %335 = dma.done [#allocation9], 1024
        $region64: #{tpu_custom_call.1} parent=47 // pred_fallthru
          _
        %s336 = sand.u32 %s36, 1
        %s337 = scalar_lea.sflag [#allocation3], %s336
        %s338 = sand.u32 %s36, 1
        %s339 = smul.addr %s338, 8
        %s340 = scalar_lea.vmem [#allocation2], %s339
        %p341 = pneg %p49
        %p342 = pneg %p46
        %p343 = scmp.lt.s32.totalorder %s28, 2
        %s344 = scalar_select %p343, %s28, 2
        %s345 = smul.addr %s344, 8
        %s346 = scalar_lea.vmem %s1, %s345
        %p347 = pneg %p75
        %p348 = pneg %p72
        %s349 = sand.u32 %s28, 1
        %s350 = scalar_lea.sflag [#allocation6], %s349
        %s351 = sand.u32 %s88, 1
        %s352 = smul.addr %s351, 8
        %s353 = scalar_lea.vmem [#allocation5], %s352
        %p354 = pneg %p101
        %p355 = pneg %p98
        %p356 = pneg %p122
        %p357 = pneg %p119
        %p358 = pneg %p143
        %p359 = pneg %p140
        %p360 = pneg %p164
        %p361 = pneg %p161
        %p362 = pneg %p185
        %p363 = pneg %p182
        %p364 = pneg %p211
        %p365 = pneg %p208
        %s366 = sand.u32 %s198, 1
        %s367 = scalar_lea.sflag [#allocation4], %s366
        %s368 = sand.u32 %s198, 1
        %s369 = scalar_lea.vmem [#allocation10], %s368
        %p370 = scmp.lt.s32.totalorder %s28, 2
        %s371 = scalar_select %p370, %s28, 2
        %s372 = smul.addr %s371, 8
        %s373 = scalar_lea.vmem %s1, %s372
        %v374 = vld [vmem:[%s314] sm:$0xff]
        %v375 = vld [vmem:[%s3] sm:$0xff]
        %v376 = vld [vmem:[%s3 + $0x8] sm:$0xff]
        %v377 = vld [vmem:[%s3 + $0x10] sm:$0xff]
        %v378 = vld [vmem:[%s3 + $0x18] sm:$0xff]
        %v379 = vld [vmem:[%s373] sm:$0xff]
        %v380 = vld [vmem:[#allocation7] sm:$0xff]
        %vm381 = vcmask 64512
        %v383 = vsel %vm381, %v379, 0
        %385 = vmatprep.subr.mxu0 0.0
        %386 = vmatpush1.msra.mxu0 0.0
        %387 = vmatprep.subr.mxu0 0.0
        %388 = vmatpush1.msra.mxu0 0.0
        %389 = vmatprep.subr.mxu0 0.0
        %390 = vmatpush1.msra.mxu0 0.0
        %391 = vmatprep.subr.mxu0 0.0
        %392 = vmatpush1.msra.mxu0 0.0
        %393 = vmatprep.subr.mxu0 0.0
        %394 = vmatpush1.msra.mxu0 0.0
        %395 = vmatprep.subr.mxu0 0.0
        %396 = vmatpush1.msra.mxu0 0.0
        %397 = vmatprep.subr.mxu0 0.0
        %398 = vmatpush1.msra.mxu0 0.0
        %399 = vmatprep.subr.mxu0 0.0
        %400 = vmatpush1.msra.mxu0 0.0
        %401 = vmatprep.subr.mxu0 0.0
        %402 = vmatpush1.msra.mxu0 0.0
        %403 = vmatprep.subr.mxu0 0.0
        %404 = vmatpush1.msra.mxu0 0.0
        %405 = vmatprep.subr.mxu0 0.0
        %406 = vmatpush1.msra.mxu0 0.0
        %407 = vmatprep.subr.mxu0 0.0
        %408 = vmatpush1.msra.mxu0 0.0
        %409 = vmatprep.subr.mxu0 0.0
        %410 = vmatpush1.msra.mxu0 0.0
        %411 = vmatprep.subr.mxu0 0.0
        %412 = vmatpush1.msra.mxu0 0.0
        %413 = vmatprep.subr.mxu0 0.0
        %414 = vmatpush1.msra.mxu0 0.0
        %415 = vmatprep.subr.mxu0 0.0
        %416 = vmatpush1.msra.mxu0 %v380
        %417 = vmatprep.subr.mxu0 0.0
        %418 = vmatpush2.msra.mxu0 0.0
        %419 = vmatprep.subr.mxu0 0.0
        %420 = vmatpush2.msra.mxu0 0.0
        %421 = vmatprep.subr.mxu0 0.0
        %422 = vmatpush2.msra.mxu0 0.0
        %423 = vmatprep.subr.mxu0 0.0
        %424 = vmatpush2.msra.mxu0 0.0
        %425 = vmatprep.subr.mxu0 0.0
        %426 = vmatpush2.msra.mxu0 0.0
        %427 = vmatprep.subr.mxu0 0.0
        %428 = vmatpush2.msra.mxu0 0.0
        %429 = vmatprep.subr.mxu0 0.0
        %430 = vmatpush2.msra.mxu0 0.0
        %431 = vmatprep.subr.mxu0 0.0
        %432 = vmatpush2.msra.mxu0 0.0
        %433 = vmatprep.subr.mxu0 0.0
        %434 = vmatpush2.msra.mxu0 0.0
        %435 = vmatprep.subr.mxu0 0.0
        %436 = vmatpush2.msra.mxu0 0.0
        %437 = vmatprep.subr.mxu0 0.0
        %438 = vmatpush2.msra.mxu0 0.0
        %439 = vmatprep.subr.mxu0 0.0
        %440 = vmatpush2.msra.mxu0 0.0
        %441 = vmatprep.subr.mxu0 0.0
        %442 = vmatpush2.msra.mxu0 0.0
        %443 = vmatprep.subr.mxu0 0.0
        %444 = vmatpush2.msra.mxu0 0.0
        %445 = vmatprep.subr.mxu0 0.0
        %446 = vmatpush2.msra.mxu0 0.0
        %447 = vmatprep.subr.mxu0 0.0
        %448 = vmatpush2.msra.mxu0 0.0
        %449 = vmatprep.mubr.f32.mxu0 0.0
        %450 = vmatmul.mubr.f32.gmra.mxu0 %v383
        %v451 = vpop.f32.mrf.mxu0
        %v452 = vadd.f32 0.0, %v451
        %v453 = vpop.f32.mrf.mxu0
        %454 = vdwg.mxu0
        %vm455 = vcmask 261120
        %v457 = vsel %vm455, %v374, 0
        %459 = vmatprep.subr.mxu0 0.0
        %460 = vmatpush1.msra.mxu0 0.0
        %461 = vmatprep.subr.mxu0 0.0
        %462 = vmatpush1.msra.mxu0 0.0
        %463 = vmatprep.subr.mxu0 0.0
        %464 = vmatpush1.msra.mxu0 0.0
        %465 = vmatprep.subr.mxu0 0.0
        %466 = vmatpush1.msra.mxu0 0.0
        %467 = vmatprep.subr.mxu0 0.0
        %468 = vmatpush1.msra.mxu0 0.0
        %469 = vmatprep.subr.mxu0 0.0
        %470 = vmatpush1.msra.mxu0 0.0
        %471 = vmatprep.subr.mxu0 0.0
        %472 = vmatpush1.msra.mxu0 0.0
        %473 = vmatprep.subr.mxu0 0.0
        %474 = vmatpush1.msra.mxu0 0.0
        %475 = vmatprep.subr.mxu0 0.0
        %476 = vmatpush1.msra.mxu0 0.0
        %477 = vmatprep.subr.mxu0 0.0
        %478 = vmatpush1.msra.mxu0 0.0
        %479 = vmatprep.subr.mxu0 0.0
        %480 = vmatpush1.msra.mxu0 0.0
        %481 = vmatprep.subr.mxu0 0.0
        %482 = vmatpush1.msra.mxu0 0.0
        %483 = vmatprep.subr.mxu0 0.0
        %484 = vmatpush1.msra.mxu0 %v378
        %485 = vmatprep.subr.mxu0 0.0
        %486 = vmatpush1.msra.mxu0 %v377
        %487 = vmatprep.subr.mxu0 0.0
        %488 = vmatpush1.msra.mxu0 %v376
        %489 = vmatprep.subr.mxu0 0.0
        %490 = vmatpush1.msra.mxu0 %v375
        %491 = vmatprep.subr.mxu0 0.0
        %492 = vmatpush2.msra.mxu0 0.0
        %493 = vmatprep.subr.mxu0 0.0
        %494 = vmatpush2.msra.mxu0 0.0
        %495 = vmatprep.subr.mxu0 0.0
        %496 = vmatpush2.msra.mxu0 0.0
        %497 = vmatprep.subr.mxu0 0.0
        %498 = vmatpush2.msra.mxu0 0.0
        %499 = vmatprep.subr.mxu0 0.0
        %500 = vmatpush2.msra.mxu0 0.0
        %501 = vmatprep.subr.mxu0 0.0
        %502 = vmatpush2.msra.mxu0 0.0
        %503 = vmatprep.subr.mxu0 0.0
        %504 = vmatpush2.msra.mxu0 0.0
        %505 = vmatprep.subr.mxu0 0.0
        %506 = vmatpush2.msra.mxu0 0.0
        %507 = vmatprep.subr.mxu0 0.0
        %508 = vmatpush2.msra.mxu0 0.0
        %509 = vmatprep.subr.mxu0 0.0
        %510 = vmatpush2.msra.mxu0 0.0
        %511 = vmatprep.subr.mxu0 0.0
        %512 = vmatpush2.msra.mxu0 0.0
        %513 = vmatprep.subr.mxu0 0.0
        %514 = vmatpush2.msra.mxu0 0.0
        %515 = vmatprep.subr.mxu0 0.0
        %516 = vmatpush2.msra.mxu0 0.0
        %517 = vmatprep.subr.mxu0 0.0
        %518 = vmatpush2.msra.mxu0 0.0
        %519 = vmatprep.subr.mxu0 0.0
        %520 = vmatpush2.msra.mxu0 0.0
        %521 = vmatprep.subr.mxu0 0.0
        %522 = vmatpush2.msra.mxu0 0.0
        %523 = vmatprep.mubr.f32.mxu0 0.0
        %524 = vmatmul.mubr.f32.gmra.mxu0 %v457
        %v525 = vpop.f32.mrf.mxu0
        %v526 = vadd.f32 %v452, %v525
        %v527 = vpop.f32.mrf.mxu0
        %528 = vdwg.mxu0
        %v529 = vld [vmem:[%s323] sm:$0xff]
        %v530 = vld [vmem:[#allocation8] sm:$0xff]
        %v531 = vld [vmem:[#allocation8 + $0x8] sm:$0xff]
        %v532 = vld [vmem:[#allocation8 + $0x10] sm:$0xff]
        %v533 = vld [vmem:[#allocation8 + $0x18] sm:$0xff]
        %v534 = vld [vmem:[#allocation8 + $0x20] sm:$0xff]
        %v535 = vld [vmem:[#allocation8 + $0x28] sm:$0xff]
        %v536 = vld [vmem:[#allocation8 + $0x30] sm:$0xff]
        %v537 = vld [vmem:[#allocation8 + $0x38] sm:$0xff]
        %vm538 = vcmask 523264
        %v540 = vsel %vm538, %v529, 0
        %542 = vmatprep.subr.mxu0 0.0
        %543 = vmatpush1.msra.mxu0 0.0
        %544 = vmatprep.subr.mxu0 0.0
        %545 = vmatpush1.msra.mxu0 0.0
        %546 = vmatprep.subr.mxu0 0.0
        %547 = vmatpush1.msra.mxu0 0.0
        %548 = vmatprep.subr.mxu0 0.0
        %549 = vmatpush1.msra.mxu0 0.0
        %550 = vmatprep.subr.mxu0 0.0
        %551 = vmatpush1.msra.mxu0 0.0
        %552 = vmatprep.subr.mxu0 0.0
        %553 = vmatpush1.msra.mxu0 0.0
        %554 = vmatprep.subr.mxu0 0.0
        %555 = vmatpush1.msra.mxu0 0.0
        %556 = vmatprep.subr.mxu0 0.0
        %557 = vmatpush1.msra.mxu0 0.0
        %558 = vmatprep.subr.mxu0 0.0
        %559 = vmatpush1.msra.mxu0 %v537
        %560 = vmatprep.subr.mxu0 0.0
        %561 = vmatpush1.msra.mxu0 %v536
        %562 = vmatprep.subr.mxu0 0.0
        %563 = vmatpush1.msra.mxu0 %v535
        %564 = vmatprep.subr.mxu0 0.0
        %565 = vmatpush1.msra.mxu0 %v534
        %566 = vmatprep.subr.mxu0 0.0
        %567 = vmatpush1.msra.mxu0 %v533
        %568 = vmatprep.subr.mxu0 0.0
        %569 = vmatpush1.msra.mxu0 %v532
        %570 = vmatprep.subr.mxu0 0.0
        %571 = vmatpush1.msra.mxu0 %v531
        %572 = vmatprep.subr.mxu0 0.0
        %573 = vmatpush1.msra.mxu0 %v530
        %574 = vmatprep.subr.mxu0 0.0
        %575 = vmatpush2.msra.mxu0 0.0
        %576 = vmatprep.subr.mxu0 0.0
        %577 = vmatpush2.msra.mxu0 0.0
        %578 = vmatprep.subr.mxu0 0.0
        %579 = vmatpush2.msra.mxu0 0.0
        %580 = vmatprep.subr.mxu0 0.0
        %581 = vmatpush2.msra.mxu0 0.0
        %582 = vmatprep.subr.mxu0 0.0
        %583 = vmatpush2.msra.mxu0 0.0
        %584 = vmatprep.subr.mxu0 0.0
        %585 = vmatpush2.msra.mxu0 0.0
        %586 = vmatprep.subr.mxu0 0.0
        %587 = vmatpush2.msra.mxu0 0.0
        %588 = vmatprep.subr.mxu0 0.0
        %589 = vmatpush2.msra.mxu0 0.0
        %590 = vmatprep.subr.mxu0 0.0
        %591 = vmatpush2.msra.mxu0 0.0
        %592 = vmatprep.subr.mxu0 0.0
        %593 = vmatpush2.msra.mxu0 0.0
        %594 = vmatprep.subr.mxu0 0.0
        %595 = vmatpush2.msra.mxu0 0.0
        %596 = vmatprep.subr.mxu0 0.0
        %597 = vmatpush2.msra.mxu0 0.0
        %598 = vmatprep.subr.mxu0 0.0
        %599 = vmatpush2.msra.mxu0 0.0
        %600 = vmatprep.subr.mxu0 0.0
        %601 = vmatpush2.msra.mxu0 0.0
        %602 = vmatprep.subr.mxu0 0.0
        %603 = vmatpush2.msra.mxu0 0.0
        %604 = vmatprep.subr.mxu0 0.0
        %605 = vmatpush2.msra.mxu0 0.0
        %606 = vmatprep.mubr.f32.mxu0 0.0
        %607 = vmatmul.mubr.f32.gmra.mxu0 %v540
        %v608 = vpop.f32.mrf.mxu0
        %v609 = vadd.f32 0.0, %v608
        %v610 = vpop.f32.mrf.mxu0
        %611 = vdwg.mxu0
        %v612 = vadd.f32 %v526, %v609
        %v613 = vld [vmem:[%s6] sm:$0x1]
        %v614 = vlaneseq
        %v615 = vshrl.u32 %v614, 7
        %v616 = vsub.s32 0, %v615
        %v617 = vrot.slane %v613, %v616
        %v618 = vadd.f32 %v612, %v617
        %v619 = vmax.f32 %v618, 0.0
        %v620 = vld [vmem:[%s6 + $0x1] sm:$0x1]
        %v621 = vld [vmem:[%s6 + $0x2] sm:$0x1]
        %623 = vset.pattern.permute.xlu0 0
        %624 = vperm.xlu0 %623, %v621
        %v625 = vpop.permute.xlu0 %624
        %627 = vmatprep.subr.mxu0 0.0
        %628 = vmatpush1.xpose.msra.mxu0 0.0
        %629 = vmatprep.subr.mxu0 0.0
        %630 = vmatpush1.xpose.msra.mxu0 0.0
        %631 = vmatprep.subr.mxu0 0.0
        %632 = vmatpush1.xpose.msra.mxu0 0.0
        %633 = vmatprep.subr.mxu0 0.0
        %634 = vmatpush1.xpose.msra.mxu0 0.0
        %635 = vmatprep.subr.mxu0 0.0
        %636 = vmatpush1.xpose.msra.mxu0 0.0
        %637 = vmatprep.subr.mxu0 0.0
        %638 = vmatpush1.xpose.msra.mxu0 0.0
        %639 = vmatprep.subr.mxu0 0.0
        %640 = vmatpush1.xpose.msra.mxu0 0.0
        %641 = vmatprep.subr.mxu0 0.0
        %642 = vmatpush1.xpose.msra.mxu0 0.0
        %643 = vmatprep.subr.mxu0 0.0
        %644 = vmatpush1.xpose.msra.mxu0 0.0
        %645 = vmatprep.subr.mxu0 0.0
        %646 = vmatpush1.xpose.msra.mxu0 0.0
        %647 = vmatprep.subr.mxu0 0.0
        %648 = vmatpush1.xpose.msra.mxu0 0.0
        %649 = vmatprep.subr.mxu0 0.0
        %650 = vmatpush1.xpose.msra.mxu0 0.0
        %651 = vmatprep.subr.mxu0 0.0
        %652 = vmatpush1.xpose.msra.mxu0 0.0
        %653 = vmatprep.subr.mxu0 0.0
        %654 = vmatpush1.xpose.msra.mxu0 0.0
        %655 = vmatprep.subr.mxu0 0.0
        %656 = vmatpush1.xpose.msra.mxu0 0.0
        %657 = vmatprep.subr.mxu0 0.0
        %658 = vmatpush1.xpose.msra.mxu0 %v619
        %659 = vmatprep.subr.mxu0 0.0
        %660 = vmatpush2.xpose.msra.mxu0 0.0
        %661 = vmatprep.subr.mxu0 0.0
        %662 = vmatpush2.xpose.msra.mxu0 0.0
        %663 = vmatprep.subr.mxu0 0.0
        %664 = vmatpush2.xpose.msra.mxu0 0.0
        %665 = vmatprep.subr.mxu0 0.0
        %666 = vmatpush2.xpose.msra.mxu0 0.0
        %667 = vmatprep.subr.mxu0 0.0
        %668 = vmatpush2.xpose.msra.mxu0 0.0
        %669 = vmatprep.subr.mxu0 0.0
        %670 = vmatpush2.xpose.msra.mxu0 0.0
        %671 = vmatprep.subr.mxu0 0.0
        %672 = vmatpush2.xpose.msra.mxu0 0.0
        %673 = vmatprep.subr.mxu0 0.0
        %674 = vmatpush2.xpose.msra.mxu0 0.0
        %675 = vmatprep.subr.mxu0 0.0
        %676 = vmatpush2.xpose.msra.mxu0 0.0
        %677 = vmatprep.subr.mxu0 0.0
        %678 = vmatpush2.xpose.msra.mxu0 0.0
        %679 = vmatprep.subr.mxu0 0.0
        %680 = vmatpush2.xpose.msra.mxu0 0.0
        %681 = vmatprep.subr.mxu0 0.0
        %682 = vmatpush2.xpose.msra.mxu0 0.0
        %683 = vmatprep.subr.mxu0 0.0
        %684 = vmatpush2.xpose.msra.mxu0 0.0
        %685 = vmatprep.subr.mxu0 0.0
        %686 = vmatpush2.xpose.msra.mxu0 0.0
        %687 = vmatprep.subr.mxu0 0.0
        %688 = vmatpush2.xpose.msra.mxu0 0.0
        %689 = vmatprep.subr.mxu0 0.0
        %690 = vmatpush2.xpose.msra.mxu0 0.0
        %691 = vmatprep.mubr.f32.mxu0 0.0
        %692 = vmatmul.mubr.f32.gmra.mxu0 %v620
        %v693 = vpop.f32.mrf.mxu0
        %v694 = vadd.f32 %v625, %v693
        %v695 = vpop.f32.mrf.mxu0
        %696 = vdwg.mxu0
        %vm697 = vcmask 57344
        %698 = vst.msk [vmem:[%s369] sm:$0x1] %vm697, %v694
        %s699 = sand.u32 %s198, 1
        %s700 = scalar_lea.sflag [#allocation4], %s699
        %s701 = sand.u32 %s198, 1
        %s702 = scalar_lea.vmem [#allocation10], %s701
        // Predicated region
        $region65: #{tpu_custom_call.1} parent=47 // pred_check
          %p703 = pneg %p208
        $region66: #{tpu_custom_call.1} parent=47 // pred_check_branch
          %705 = sbr.rel (%p703) target = $region68
        $region67: #{tpu_custom_call.1} parent=47 // pred_region
          %s707 = ssub.s32 16, 16
          %708 = vsyncadd %s700, %s707
          %s709 = smul.addr %s28, 16
          %s710 = scalar_lea.hbm %s7, %s709
          %s712 = sshll.u32 %s702, 4
          %s713 = int_to_ptr.vmem [resolvable:$true] %s712
          %715 = dma.vmem_to_hbm [thread:$0]  %s713, 16, %s710, %s700
        $region68: #{tpu_custom_call.1} parent=47 // pred_fallthru
          _
      $region48: #{tpu_custom_call.1} parent=5 // pred_fallthru
        _
      %p716 = scmp.le.s32.totalorder 2, %s23
      // Predicated region
      $region69: #{tpu_custom_call.1} parent=5 // pred_check
        %p717 = pneg %p716
      $region70: #{tpu_custom_call.1} parent=5 // pred_check_branch
        %719 = sbr.rel (%p717) target = $region72
      $region71: #{tpu_custom_call.1} parent=5 // pred_region
        %s720 = ssub.s32 %s23, 2
        // Predicated region
        $region73: #{tpu_custom_call.1} parent=71 // pred_check
          %p721 = pneg %p214
        $region74: #{tpu_custom_call.1} parent=71 // pred_check_branch
          %723 = sbr.rel (%p721) target = $region76
        $region75: #{tpu_custom_call.1} parent=71 // pred_region
          %s724 = sand.u32 %s199, 1
          %s725 = scalar_lea.sflag [#allocation4], %s724
          %s726 = sand.u32 %s199, 1
          %s727 = scalar_lea.vmem [#allocation10], %s726
          %728 = dma.done %s725, 16
        $region76: #{tpu_custom_call.1} parent=71 // pred_fallthru
          _
      $region72: #{tpu_custom_call.1} parent=5 // pred_fallthru
        _
    $region6: #{tpu_custom_call.1} parent=1 // loop_footer
      %s27 = sadd.s32 1, %s23
    $region7: #{tpu_custom_call.1} parent=1 // loop_footer_branch
      %22 = sbr.rel target = $region3
    $region8: #{tpu_custom_call.1} parent=1 // loop_exit
      _
    %729 = vsyncpa [#allocation3], 1
    %s730 = scalar_lea.sflag [#allocation3], 1
    %731 = vsyncpa %s730, 1
    %732 = vsyncpa [#allocation6], 1
    %s733 = scalar_lea.sflag [#allocation6], 1
    %734 = vsyncpa %s733, 1
    %735 = vsyncpa [#allocation9], 1
    %736 = vsyncpa [#allocation4], 1
    %s737 = scalar_lea.sflag [#allocation4], 1
    %738 = vsyncpa %s737, 1

</llo_original>
